<compile_context>
chip_gen: v7x
topology: tpu7x:2x2x1
jax: 0.10.0
libtpu: 0.0.40
codegen_flags: <defaults>
</compile_context>

<pallas_src>
import jax
import jax.numpy as jnp
from jax.experimental import pallas as pl
from jax.experimental.pallas import tpu as pltpu

# ---- small, deterministic problem sizes (from the module spec) ----
B = 2             # batch
C = 4             # input channels (averaged away by x.mean(dim=1))
T = 128           # raw time samples (lane axis)
FRAME = 16        # samples per "frame" fed to the synthetic feature encoder
SEQ = T // FRAME  # sequence length of last_hidden_state (8)
HIDDEN = 32       # base_model.config.hidden_size
NUM_CLASSES = 5   # num_classes

# ---- lane-dense kernel geometry ----
LANES = 128                    # lane width of every in-kernel operand
CLS_COL = 64                   # column offset of the embedded classifier weight / logits
P_BIAS = LANES                 # row holding BOTH biases (b_feat @ cols 0:32, b_cls @ cols 64:69)
P_ROWS = LANES + 8             # 136 total slab rows (rows 129:136 are zero padding)

assert T == LANES and FRAME <= LANES
assert HIDDEN <= CLS_COL and CLS_COL + NUM_CLASSES <= LANES


def ecg_kernel(x_ref, p_ref, out_ref):
    # x_ref:   (B, C, T)       raw input, exactly as the module receives it
    # p_ref:   (P_ROWS, 128)   rows 0:128 combined weight slab, row 128 combined bias row
    # out_ref: (B, 128)        lane-dense result; logits live in cols CLS_COL:CLS_COL+NUM_CLASSES

    # x.mean(dim=1): per-batch channel mean (sublane reduction -> idle XLU slot)
    xm = jnp.mean(x_ref[...], axis=1)                    # (B, T)

    w = p_ref[0:LANES, :]                                # (128, 128) combined weight slab
    bias = p_ref[P_BIAS:P_BIAS + 1, :]                   # (1, 128)   combined bias row

    # synthetic base_model, CLS frame only:
    #   cols 0:HIDDEN of (xm @ w) == frame0 @ w_feat  (rows FRAME:128 of those cols are zero)
    hs = jnp.tanh(jnp.dot(xm, w, preferred_element_type=jnp.float32) + bias)   # (B, 128)

    # classifier(features[:, 0, :]):
    #   cols CLS_COL:CLS_COL+NUM_CLASSES of (hs @ w) == hs[:, 0:HIDDEN] @ w_cls,
    #   since the w_cls columns are zero below row HIDDEN; + bias adds b_cls there.
    out_ref[...] = jnp.dot(hs, w, preferred_element_type=jnp.float32) + bias   # (B, 128)


def pack_params(w_feat, b_feat, w_cls, b_cls):
    """Build the lane-dense parameter slab ONCE at init (not in the per-call path)."""
    p = jnp.zeros((P_ROWS, LANES), jnp.float32)
    p = p.at[0:FRAME, 0:HIDDEN].set(w_feat)                                 # encoder weight
    p = p.at[0:HIDDEN, CLS_COL:CLS_COL + NUM_CLASSES].set(w_cls)            # classifier weight
    p = p.at[P_BIAS, 0:HIDDEN].set(b_feat)                                  # encoder bias
    p = p.at[P_BIAS, CLS_COL:CLS_COL + NUM_CLASSES].set(b_cls)              # classifier bias
    return p


@jax.jit
def ecg_classifier(x, p):
    # steady-state forward: one gridless pallas_call + one tiny output slice
    vmem = pl.BlockSpec(memory_space=pltpu.MemorySpace.VMEM)
    out = pl.pallas_call(
        ecg_kernel,
        out_shape=jax.ShapeDtypeStruct((B, LANES), jnp.float32),
        in_specs=[vmem, vmem],
        out_specs=vmem,
    )(x, p)
    return out[:, CLS_COL:CLS_COL + NUM_CLASSES]          # (B, NUM_CLASSES)


def reference(x, w_feat, b_feat, w_cls, b_cls):
    xm = x.mean(axis=1)                                   # (B, T)
    frames = xm.reshape(B, SEQ, FRAME)
    hs = jnp.tanh(jnp.einsum("bsf,fh->bsh", frames, w_feat) + b_feat)
    return hs[:, 0, :] @ w_cls + b_cls


if __name__ == "__main__":
    key = jax.random.PRNGKey(0)
    kx, kwf, kbf, kwc, kbc = jax.random.split(key, 5)

    # deterministic synthetic inputs / parameters
    x = jax.random.normal(kx, (B, C, T), dtype=jnp.float32)
    w_feat = (jax.random.normal(kwf, (FRAME, HIDDEN), dtype=jnp.float32)
              * (1.0 / jnp.sqrt(float(FRAME))))
    b_feat = 0.01 * jax.random.normal(kbf, (HIDDEN,), dtype=jnp.float32)
    w_cls = (jax.random.normal(kwc, (HIDDEN, NUM_CLASSES), dtype=jnp.float32)
             * (1.0 / jnp.sqrt(float(HIDDEN))))
    b_cls = 0.01 * jax.random.normal(kbc, (NUM_CLASSES,), dtype=jnp.float32)

    # pack the parameter slab ONCE (hoisted out of the per-call path)
    p = jax.block_until_ready(pack_params(w_feat, b_feat, w_cls, b_cls))

    logits = ecg_classifier(x, p)
    jax.block_until_ready(logits)

    ref = reference(x, w_feat, b_feat, w_cls, b_cls)
    assert logits.shape == (B, NUM_CLASSES)
    assert jnp.allclose(logits, ref, atol=1e-5, rtol=1e-5), "mismatch vs reference"

    print("KERNEL_OK")
</pallas_src>

<mosaic_0001>
module attributes {stable_mosaic.version = 11 : i64} {
  func.func @ecg_kernel(%arg0: memref<2x4x128xf32, #tpu.memory_space<vmem>>, %arg1: memref<136x128xf32, #tpu.memory_space<vmem>>, %arg2: memref<2x128xf32, #tpu.memory_space<vmem>>) attributes {dimension_semantics = [], scalar_prefetch = 0 : i64, scratch_operands = 0 : i64, tpu.core_type = #tpu.core_type<tc>} {
    %c0 = arith.constant 0 : index
    %c0_0 = arith.constant 0 : index
    %c0_1 = arith.constant 0 : index
    %0 = vector.load %arg0[%c0, %c0_0, %c0_1] : memref<2x4x128xf32, #tpu.memory_space<vmem>>, vector<2x4x128xf32>
    %cst = arith.constant dense<0.000000e+00> : vector<2x128xf32>
    %1 = vector.multi_reduction <add>, %0, %cst [1] : vector<2x4x128xf32> to vector<2x128xf32>
    %cst_2 = arith.constant 4.000000e+00 : f32
    %2 = vector.broadcast %cst_2 : f32 to vector<2x128xf32>
    %3 = arith.divf %1, %2 : vector<2x128xf32>
    %c0_3 = arith.constant 0 : index
    %c0_4 = arith.constant 0 : index
    %4 = vector.load %arg1[%c0_3, %c0_4] : memref<136x128xf32, #tpu.memory_space<vmem>>, vector<128x128xf32>
    %c128 = arith.constant 128 : index
    %c0_5 = arith.constant 0 : index
    %5 = vector.load %arg1[%c128, %c0_5] : memref<136x128xf32, #tpu.memory_space<vmem>>, vector<1x128xf32>
    %cst_6 = arith.constant dense<0.000000e+00> : vector<2x128xf32>
    %6 = tpu.matmul %3, %4, %cst_6 {dimension_numbers = #tpu.dot_dimension_numbers<[1], [0], [0], [1], [0, 0, 1, 1], [], []>} : vector<2x128xf32>, vector<128x128xf32>, vector<2x128xf32> -> vector<2x128xf32>
    %7 = vector.broadcast %5 : vector<1x128xf32> to vector<2x128xf32>
    %8 = arith.addf %6, %7 : vector<2x128xf32>
    %9 = math.tanh %8 : vector<2x128xf32>
    %cst_7 = arith.constant dense<0.000000e+00> : vector<2x128xf32>
    %10 = tpu.matmul %9, %4, %cst_7 {dimension_numbers = #tpu.dot_dimension_numbers<[1], [0], [0], [1], [0, 0, 1, 1], [], []>} : vector<2x128xf32>, vector<128x128xf32>, vector<2x128xf32> -> vector<2x128xf32>
    %11 = vector.broadcast %5 : vector<1x128xf32> to vector<2x128xf32>
    %12 = arith.addf %10, %11 : vector<2x128xf32>
    %c0_8 = arith.constant 0 : index
    %c0_9 = arith.constant 0 : index
    %13 = vector.load %arg2[%c0_8, %c0_9] : memref<2x128xf32, #tpu.memory_space<vmem>>, vector<2x128xf32>
    tpu.vector_store %arg2[%c0_8, %c0_9], %12 {strides = array<i32>} : memref<2x128xf32, #tpu.memory_space<vmem>>, vector<2x128xf32>,
    return
  }
}

</mosaic_0001>

<llo_original>
// kernel: ecg_classifier.1
$region0: #{ecg_classifier.1}
  #allocation0 [shape = 'u32[]', space=smem, size = 0x4, offset = 0x4, fixed_abs, tag = 'smem constant byte address 0x4 - core index']
  #allocation1 [shape = 'u32[144,128]{1,0:T(1,128)}', space=vmem, size = 0x12000, scoped, tag = 'internal scratch']
  %s0 = inlined_call_operand.hbm [shape: f32[2,4,128], index: 0, kind: input, shape index: {}]
  %s1 = inlined_call_operand.hbm [shape: f32[136,128], index: 1, kind: input, shape index: {}]
  %s2 = inlined_call_operand.vmem [shape: f32[2,128], index: 2, kind: output, shape index: {}]
  %s3 = sld [smem:[#allocation0]]
  $region26: #{ecg_classifier.1} parent=0
    _
  %s5 = ssub.s32 1, %s3
  %s6 = scalar_select 0, %s5, %s3
  $region1: #{ecg_classifier.1} parent=0
    #allocation2 [shape = 'u8[4096]{0}', space=vmem, size = 0x1000, scoped, tag = 'input window, operand 0, single buffered']
    #allocation3 [shape = 's32[1]{0}', space=sflag, size = 0x4, scoped, tag = 'scoped memory for ecg_classifier.1']
    #allocation4 [shape = 'u8[69632]{0}', space=vmem, size = 0x11000, scoped, tag = 'input window, operand 1, single buffered']
    #allocation5 [shape = 's32[1]{0}', space=sflag, size = 0x4, scoped, tag = 'scoped memory for ecg_classifier.1']
    %7 = vsyncpa [#allocation3], 0
    %8 = vsyncpa [#allocation5], 0
    // Predicated region
    $region2: #{ecg_classifier.1} parent=1 // pred_check
      _
    $region3: #{ecg_classifier.1} parent=1 // pred_check_branch
      %10 = sbr.rel (0) target = $region5
    $region4: #{ecg_classifier.1} parent=1 // pred_region
      %s12 = ssub.s32 128, 128
      %13 = vsyncadd [#allocation3], %s12
      %s14 = sshll.u32 [#allocation2], 4
      %s15 = int_to_ptr.vmem [resolvable:$true] %s14
      %20 = dma.hbm_to_vmem [thread:$0]  %s0, 128, %s15, [#allocation3], 64, 64, 4
    $region5: #{ecg_classifier.1} parent=1 // pred_fallthru
      _
    // Predicated region
    $region6: #{ecg_classifier.1} parent=1 // pred_check
      _
    $region7: #{ecg_classifier.1} parent=1 // pred_check_branch
      %22 = sbr.rel (0) target = $region9
    $region8: #{ecg_classifier.1} parent=1 // pred_region
      %s24 = ssub.s32 2176, 2176
      %25 = vsyncadd [#allocation5], %s24
      %s26 = sshll.u32 [#allocation4], 4
      %s27 = int_to_ptr.vmem [resolvable:$true] %s26
      %32 = dma.hbm_to_vmem [thread:$0]  %s1, 2176, %s27, [#allocation5], 128, 128, 8
    $region9: #{ecg_classifier.1} parent=1 // pred_fallthru
      _
    // Predicated region
    $region10: #{ecg_classifier.1} parent=1 // pred_check
      _
    $region11: #{ecg_classifier.1} parent=1 // pred_check_branch
      %34 = sbr.rel (0) target = $region13
    $region12: #{ecg_classifier.1} parent=1 // pred_region
      %35 = dma.done [#allocation3], 128
    $region13: #{ecg_classifier.1} parent=1 // pred_fallthru
      _
    // Predicated region
    $region14: #{ecg_classifier.1} parent=1 // pred_check
      _
    $region15: #{ecg_classifier.1} parent=1 // pred_check_branch
      %37 = sbr.rel (0) target = $region17
    $region16: #{ecg_classifier.1} parent=1 // pred_region
      %38 = dma.done [#allocation5], 2176
    $region17: #{ecg_classifier.1} parent=1 // pred_fallthru
      _
    %v39 = vld [vmem:[#allocation2] sm:$0xf]
    %v40 = vld [vmem:[#allocation2 + $0x4] sm:$0xf]
    %vm41 = vcmask 1043456
    %v42 = vsel %vm41, %v39, 0.0
    %v43 = vrot.slane %v42, 4
    %v44 = vadd.f32 %v42, %v43
    %v45 = vrot.slane %v44, 2
    %v46 = vadd.f32 %v44, %v45
    %v47 = vrot.slane %v46, 1
    %v48 = vadd.f32 %v46, %v47
    %v49 = vsel %vm41, %v40, 0.0
    %v50 = vrot.slane %v49, 4
    %v51 = vadd.f32 %v49, %v50
    %v52 = vrot.slane %v51, 2
    %v53 = vadd.f32 %v51, %v52
    %v54 = vrot.slane %v53, 1
    %v55 = vadd.f32 %v53, %v54
    %v56 = vrcp.pop 4.0
    %v57 = vmul.f32 %v48, %v56
    %v58 = vmul.f32 %v55, %v56
    %v59 = vld [vmem:[#allocation4] sm:$0xff]
    %v60 = vld [vmem:[#allocation4 + $0x8] sm:$0xff]
    %v61 = vld [vmem:[#allocation4 + $0x10] sm:$0xff]
    %v62 = vld [vmem:[#allocation4 + $0x18] sm:$0xff]
    %v63 = vld [vmem:[#allocation4 + $0x20] sm:$0xff]
    %v64 = vld [vmem:[#allocation4 + $0x28] sm:$0xff]
    %v65 = vld [vmem:[#allocation4 + $0x30] sm:$0xff]
    %v66 = vld [vmem:[#allocation4 + $0x38] sm:$0xff]
    %v67 = vld [vmem:[#allocation4 + $0x40] sm:$0xff]
    %v68 = vld [vmem:[#allocation4 + $0x48] sm:$0xff]
    %v69 = vld [vmem:[#allocation4 + $0x50] sm:$0xff]
    %v70 = vld [vmem:[#allocation4 + $0x58] sm:$0xff]
    %v71 = vld [vmem:[#allocation4 + $0x60] sm:$0xff]
    %v72 = vld [vmem:[#allocation4 + $0x68] sm:$0xff]
    %v73 = vld [vmem:[#allocation4 + $0x70] sm:$0xff]
    %v74 = vld [vmem:[#allocation4 + $0x78] sm:$0xff]
    %v75 = vld [vmem:[#allocation4 + $0x80] sm:$0x1]
    %v76 = vlaneseq
    %v77 = vshrl.u32 %v76, 7
    %v78 = vsub.s32 0, %v77
    %v79 = vrot.slane %v75, %v78
    %vm82 = vcmask 1041409
    %v83 = vsel %vm82, %v58, %v57
    %85 = vmatprep.subr.mxu0 0.0
    %86 = vmatpush1.msra.mxu0 %v59
    %87 = vmatprep.subr.mxu0 0.0
    %88 = vmatpush1.msra.mxu0 %v60
    %89 = vmatprep.subr.mxu0 0.0
    %90 = vmatpush1.msra.mxu0 %v61
    %91 = vmatprep.subr.mxu0 0.0
    %92 = vmatpush1.msra.mxu0 %v62
    %93 = vmatprep.subr.mxu0 0.0
    %94 = vmatpush1.msra.mxu0 %v63
    %95 = vmatprep.subr.mxu0 0.0
    %96 = vmatpush1.msra.mxu0 %v64
    %97 = vmatprep.subr.mxu0 0.0
    %98 = vmatpush1.msra.mxu0 %v65
    %99 = vmatprep.subr.mxu0 0.0
    %100 = vmatpush1.msra.mxu0 %v66
    %101 = vmatprep.subr.mxu0 0.0
    %102 = vmatpush1.msra.mxu0 %v67
    %103 = vmatprep.subr.mxu0 0.0
    %104 = vmatpush1.msra.mxu0 %v68
    %105 = vmatprep.subr.mxu0 0.0
    %106 = vmatpush1.msra.mxu0 %v69
    %107 = vmatprep.subr.mxu0 0.0
    %108 = vmatpush1.msra.mxu0 %v70
    %109 = vmatprep.subr.mxu0 0.0
    %110 = vmatpush1.msra.mxu0 %v71
    %111 = vmatprep.subr.mxu0 0.0
    %112 = vmatpush1.msra.mxu0 %v72
    %113 = vmatprep.subr.mxu0 0.0
    %114 = vmatpush1.msra.mxu0 %v73
    %115 = vmatprep.subr.mxu0 0.0
    %116 = vmatpush1.msra.mxu0 %v74
    %117 = vmatprep.subr.mxu0 0.0
    %118 = vmatpush1.msra.mxu0 0.0
    %119 = vmatprep.subr.mxu0 0.0
    %120 = vmatpush1.msra.mxu0 0.0
    %121 = vmatprep.subr.mxu0 0.0
    %122 = vmatpush1.msra.mxu0 0.0
    %123 = vmatprep.subr.mxu0 0.0
    %124 = vmatpush1.msra.mxu0 0.0
    %125 = vmatprep.subr.mxu0 0.0
    %126 = vmatpush1.msra.mxu0 0.0
    %127 = vmatprep.subr.mxu0 0.0
    %128 = vmatpush1.msra.mxu0 0.0
    %129 = vmatprep.subr.mxu0 0.0
    %130 = vmatpush1.msra.mxu0 0.0
    %131 = vmatprep.subr.mxu0 0.0
    %132 = vmatpush1.msra.mxu0 0.0
    %133 = vmatprep.subr.mxu0 0.0
    %134 = vmatpush1.msra.mxu0 0.0
    %135 = vmatprep.subr.mxu0 0.0
    %136 = vmatpush1.msra.mxu0 0.0
    %137 = vmatprep.subr.mxu0 0.0
    %138 = vmatpush1.msra.mxu0 0.0
    %139 = vmatprep.subr.mxu0 0.0
    %140 = vmatpush1.msra.mxu0 0.0
    %141 = vmatprep.subr.mxu0 0.0
    %142 = vmatpush1.msra.mxu0 0.0
    %143 = vmatprep.subr.mxu0 0.0
    %144 = vmatpush1.msra.mxu0 0.0
    %145 = vmatprep.subr.mxu0 0.0
    %146 = vmatpush1.msra.mxu0 0.0
    %147 = vmatprep.subr.mxu0 0.0
    %148 = vmatpush1.msra.mxu0 0.0
    %149 = vmatprep.mubr.f32.mxu0 0.0
    %150 = vmatmul.mubr.f32.gmra.mrb[0].mxu0 %v83
    %v151 = vpop.f32.mrb[0].mxu0
    %v152 = vadd.f32 %v79, %v151
    %v153 = vpop.f32.mrb[0].mxu0
    %154 = vdwg.mxu0
    %v155 = vtanh.pop %v152
    %156 = vmatprep.subr.mxu0 0.0
    %157 = vmatpush1.msra.mxu0 %v59
    %158 = vmatprep.subr.mxu0 0.0
    %159 = vmatpush1.msra.mxu0 %v60
    %160 = vmatprep.subr.mxu0 0.0
    %161 = vmatpush1.msra.mxu0 %v61
    %162 = vmatprep.subr.mxu0 0.0
    %163 = vmatpush1.msra.mxu0 %v62
    %164 = vmatprep.subr.mxu0 0.0
    %165 = vmatpush1.msra.mxu0 %v63
    %166 = vmatprep.subr.mxu0 0.0
    %167 = vmatpush1.msra.mxu0 %v64
    %168 = vmatprep.subr.mxu0 0.0
    %169 = vmatpush1.msra.mxu0 %v65
    %170 = vmatprep.subr.mxu0 0.0
    %171 = vmatpush1.msra.mxu0 %v66
    %172 = vmatprep.subr.mxu0 0.0
    %173 = vmatpush1.msra.mxu0 %v67
    %174 = vmatprep.subr.mxu0 0.0
    %175 = vmatpush1.msra.mxu0 %v68
    %176 = vmatprep.subr.mxu0 0.0
    %177 = vmatpush1.msra.mxu0 %v69
    %178 = vmatprep.subr.mxu0 0.0
    %179 = vmatpush1.msra.mxu0 %v70
    %180 = vmatprep.subr.mxu0 0.0
    %181 = vmatpush1.msra.mxu0 %v71
    %182 = vmatprep.subr.mxu0 0.0
    %183 = vmatpush1.msra.mxu0 %v72
    %184 = vmatprep.subr.mxu0 0.0
    %185 = vmatpush1.msra.mxu0 %v73
    %186 = vmatprep.subr.mxu0 0.0
    %187 = vmatpush1.msra.mxu0 %v74
    %188 = vmatprep.subr.mxu0 0.0
    %189 = vmatpush1.msra.mxu0 0.0
    %190 = vmatprep.subr.mxu0 0.0
    %191 = vmatpush1.msra.mxu0 0.0
    %192 = vmatprep.subr.mxu0 0.0
    %193 = vmatpush1.msra.mxu0 0.0
    %194 = vmatprep.subr.mxu0 0.0
    %195 = vmatpush1.msra.mxu0 0.0
    %196 = vmatprep.subr.mxu0 0.0
    %197 = vmatpush1.msra.mxu0 0.0
    %198 = vmatprep.subr.mxu0 0.0
    %199 = vmatpush1.msra.mxu0 0.0
    %200 = vmatprep.subr.mxu0 0.0
    %201 = vmatpush1.msra.mxu0 0.0
    %202 = vmatprep.subr.mxu0 0.0
    %203 = vmatpush1.msra.mxu0 0.0
    %204 = vmatprep.subr.mxu0 0.0
    %205 = vmatpush1.msra.mxu0 0.0
    %206 = vmatprep.subr.mxu0 0.0
    %207 = vmatpush1.msra.mxu0 0.0
    %208 = vmatprep.subr.mxu0 0.0
    %209 = vmatpush1.msra.mxu0 0.0
    %210 = vmatprep.subr.mxu0 0.0
    %211 = vmatpush1.msra.mxu0 0.0
    %212 = vmatprep.subr.mxu0 0.0
    %213 = vmatpush1.msra.mxu0 0.0
    %214 = vmatprep.subr.mxu0 0.0
    %215 = vmatpush1.msra.mxu0 0.0
    %216 = vmatprep.subr.mxu0 0.0
    %217 = vmatpush1.msra.mxu0 0.0
    %218 = vmatprep.subr.mxu0 0.0
    %219 = vmatpush1.msra.mxu0 0.0
    %220 = vmatprep.mubr.f32.mxu0 0.0
    %221 = vmatmul.mubr.f32.gmra.mrb[0].mxu0 %v155
    %v222 = vpop.f32.mrb[0].mxu0
    %v223 = vadd.f32 %v79, %v222
    %v224 = vpop.f32.mrb[0].mxu0
    %225 = vdwg.mxu0
    %226 = vst [vmem:[%s2] sm:$0x3] %v223
    // Predicated region
    $region18: #{ecg_classifier.1} parent=1 // pred_check
      _
    $region19: #{ecg_classifier.1} parent=1 // pred_check_branch
      %228 = sbr.rel (0) target = $region21
    $region20: #{ecg_classifier.1} parent=1 // pred_region
      _
    $region21: #{ecg_classifier.1} parent=1 // pred_fallthru
      _
    // Predicated region
    $region22: #{ecg_classifier.1} parent=1 // pred_check
      _
    $region23: #{ecg_classifier.1} parent=1 // pred_check_branch
      %230 = sbr.rel (0) target = $region25
    $region24: #{ecg_classifier.1} parent=1 // pred_region
      _
    $region25: #{ecg_classifier.1} parent=1 // pred_fallthru
      _
    %231 = vsyncpa [#allocation3], 1
    %232 = vsyncpa [#allocation5], 1

</llo_original>
